<compile_context>
chip_gen: v6e
topology: v6e:2x2x1
jax: 0.10.0
libtpu: 0.0.40
codegen_flags: <defaults>
</compile_context>

<pallas_src>
import numpy as np
import jax
import jax.numpy as jnp
from jax.experimental import pallas as pl
from jax.experimental.pallas import tpu as pltpu


# ----------------------------------------------------------------------------
# Host-side constant construction (plain numpy; deterministic)
# ----------------------------------------------------------------------------
def _round_up(x, m):
    return ((x + m - 1) // m) * m


def _hamming_periodic(n_fft):
    # torch.hamming_window(n_fft) default: periodic=True, alpha=0.54, beta=0.46
    return (0.54 - 0.46 * np.cos(2.0 * np.pi * np.arange(n_fft) / n_fft)).astype(
        np.float32
    )


def _irfft_bases(n_fft):
    """Real/imag inverse-rDFT bases: y = Xr @ Kr + Xi @ Ki  (includes 1/n_fft)."""
    freqs = n_fft // 2 + 1
    n = np.arange(n_fft)
    k = np.arange(freqs)
    ang = 2.0 * np.pi * np.outer(k, n) / n_fft            # (F, n_fft)
    coef = np.full((freqs, 1), 2.0)
    coef[0, 0] = 1.0
    if n_fft % 2 == 0:
        coef[-1, 0] = 1.0                                  # Nyquist bin
    kr = (coef * np.cos(ang)) / n_fft
    ki = (-coef * np.sin(ang)) / n_fft
    return kr.astype(np.float32), ki.astype(np.float32)


def _vmem_limit_bytes():
    """Generation-aware scoped-VMEM limit (v7x has 64 MiB physical vs 128)."""
    cap = None
    try:
        info = pltpu.get_tpu_info()
        cap = getattr(info, "vmem_capacity_bytes", None)
    except Exception:
        cap = None
    if cap is None:
        cap = 128 * 1024 * 1024
    if cap <= 64 * 1024 * 1024:          # v7x-class part
        return 32 * 1024 * 1024
    return 48 * 1024 * 1024              # v5e / v6e (128 MiB physical)


def _pick_t_tile(t_work, kpad, R, hop_pad, vmem_limit):
    """Largest MXU-friendly frame tile that fits the VMEM budget."""
    basis_bytes = kpad * R * hop_pad * 2                        # bf16 basis
    fixed = 2 * basis_bytes + max(R - 1, 1) * hop_pad * 4       # conservative
    per_row = (2 * kpad * 2          # x tile, bf16, double-buffered
               + 2 * hop_pad * 4     # env_inv tile, f32, double-buffered
               + 2 * hop_pad * 4     # out tile, f32, double-buffered
               + hop_pad * 4         # OLA accumulator row
               + R * hop_pad * 4)    # matmul result (frames) intermediate
    budget = int(vmem_limit * 0.7) - fixed
    if budget <= per_row * 8:
        t_cap = 8
    else:
        t_cap = (budget // per_row) // 8 * 8
    t_tile = 256                      # multiple of 128 and 256 -> good on all gens
    while t_tile > 8 and t_tile > t_cap:
        t_tile //= 2
    t_tile = max(8, t_tile)
    t_needed = _round_up(max(t_work, 1), 8)
    return min(t_tile, t_needed)


# ----------------------------------------------------------------------------
# Pallas kernel
# ----------------------------------------------------------------------------
def _make_istft_kernel(t_tile, R, hop_pad, num_t_tiles):
    use_carry = (R > 1) and (num_t_tiles > 1)

    def kernel(x_ref, k_ref, envinv_ref, out_ref, acc_ref, carry_ref):
        # x_ref:      (1, t_tile, kpad)         bf16  [Re|Im] spectrogram tile
        # k_ref:      (kpad, R*hop_pad)         bf16  window-folded iDFT basis,
        #                                             lane-aligned hop slabs
        # envinv_ref: (t_tile, hop_pad)         f32   1 / OLA window envelope
        # out_ref:    (1, t_tile, hop_pad)      f32   finalized OLA rows
        # acc_ref:    (t_tile + R - 1, hop_pad) f32   local OLA accumulator
        # carry_ref:  (max(R-1,1), hop_pad)     f32   overlap tail carried over t
        t = pl.program_id(1)

        # One fused MXU pass (bf16 x bf16 -> f32 accumulate).
        frames = jnp.dot(
            x_ref[0], k_ref[...], preferred_element_type=jnp.float32
        )  # (t_tile, R*hop_pad)

        # Hop-folded overlap-add; slab 0 initializes acc (saves a zero+RMW pass).
        acc_ref[0:t_tile, :] = frames[:, 0:hop_pad]
        if R > 1:
            acc_ref[t_tile:t_tile + R - 1, :] = jnp.zeros(
                (R - 1, hop_pad), jnp.float32
            )
        for r in range(1, R):
            acc_ref[r:r + t_tile, :] = (
                acc_ref[r:r + t_tile, :]
                + frames[:, r * hop_pad:(r + 1) * hop_pad]
            )

        if use_carry:
            # Add the overlap tail carried from the previous time tile (same b),
            # then stash this tile's tail for the next one.
            @pl.when(t > 0)
            def _():
                acc_ref[0:R - 1, :] = acc_ref[0:R - 1, :] + carry_ref[...]

            carry_ref[...] = acc_ref[t_tile:t_tile + R - 1, :]

        # Rows [0, t_tile) are now final: normalize and emit lane-dense.
        out_ref[0] = acc_ref[0:t_tile, :] * envinv_ref[...]

    return kernel


# ----------------------------------------------------------------------------
# Wrapper (= ConviSTFT.forward)
# ----------------------------------------------------------------------------
def conv_istft(x, n_fft, hop_length, win_length, t_tile=None):
    """x: complex spectrogram (B, n_fft//2+1, frames). Returns (B, hop*(frames-1))."""
    del win_length                       # the torch module passes win_length=n_fft
    B, freqs, T = x.shape
    assert freqs == n_fft // 2 + 1, "frequency axis must be n_fft//2 + 1"
    assert n_fft % hop_length == 0, "hop-folded OLA requires hop_length | n_fft"

    hop = hop_length
    R = n_fft // hop                     # frames overlapping any output row
    trim = n_fft // 2
    L = hop * (T - 1)                    # center=True output length

    two_f = 2 * freqs
    kpad = _round_up(two_f, 128)         # contraction dim padded to lanes
    hop_pad = _round_up(hop, 128)        # lane-dense OLA / output width

    # OLA rows that must be produced to cover the kept window [trim, trim + L).
    needed_rows = -(-(trim + L) // hop)
    t_work = max(T, needed_rows)

    vmem_limit = _vmem_limit_bytes()
    if t_tile is None:
        t_tile = _pick_t_tile(t_work, kpad, R, hop_pad, vmem_limit)
    t_tile = max(8, _round_up(int(t_tile), 8))
    num_t = -(-t_work // t_tile)
    t_pad = num_t * t_tile

    # --- host-side constants --------------------------------------------------
    kr, ki = _irfft_bases(n_fft)
    win = _hamming_periodic(n_fft)
    kfull = np.concatenate([kr, ki], axis=0) * win[None, :]      # (2F, n_fft)

    # Fused basis, relaid into R lane-aligned slabs of width hop_pad.
    basis_np = np.zeros((kpad, R * hop_pad), np.float32)
    for r in range(R):
        basis_np[:two_f, r * hop_pad:r * hop_pad + hop] = kfull[:, r * hop:(r + 1) * hop]
    basis_dev = jnp.asarray(basis_np, dtype=jnp.bfloat16)

    # Squared-window OLA envelope -> masked inverse, laid out (t_pad, hop_pad).
    l_full = (T + R - 1) * hop
    wsq = win.astype(np.float64) ** 2
    env = np.zeros(max(l_full, t_pad * hop), np.float64)
    for f in range(T):
        env[f * hop:f * hop + n_fft] += wsq
    env = env[:t_pad * hop]
    env_inv = np.where(env > 1e-11, 1.0 / np.maximum(env, 1e-30), 0.0)
    env_inv_pad = np.zeros((t_pad, hop_pad), np.float32)
    env_inv_pad[:, :hop] = env_inv.reshape(t_pad, hop).astype(np.float32)
    env_dev = jnp.asarray(env_inv_pad)

    # --- activations: [Re|Im] as (B, T_pad, kpad) bf16 ------------------------
    # TODO(synk): produce this layout upstream (or via allow_input_fusion) to
    # avoid the extra HBM pass over the spectrogram.
    xr = jnp.real(x).astype(jnp.float32)
    xi = jnp.imag(x).astype(jnp.float32)
    xcat = jnp.swapaxes(jnp.concatenate([xr, xi], axis=1), 1, 2)   # (B, T, 2F)
    xcat = jnp.pad(xcat, ((0, 0), (0, t_pad - T), (0, kpad - two_f)))
    xcat = xcat.astype(jnp.bfloat16)

    kernel = _make_istft_kernel(t_tile, R, hop_pad, num_t)

    cost = pl.CostEstimate(
        flops=2 * B * t_pad * kpad * (R * hop_pad),
        transcendentals=0,
        bytes_accessed=(B * t_pad * kpad * 2 + kpad * R * hop_pad * 2
                        + t_pad * hop_pad * 4 + B * t_pad * hop_pad * 4),
    )

    def _build(single_buffer_consts):
        basis_kwargs = {}
        if single_buffer_consts:
            # Grid-invariant constant: no need for double-buffering.
            basis_kwargs = dict(pipeline_mode=pl.Buffered(1))
        return pl.pallas_call(
            kernel,
            out_shape=jax.ShapeDtypeStruct((B, t_pad, hop_pad), jnp.float32),
            grid=(B, num_t),
            in_specs=[
                pl.BlockSpec((1, t_tile, kpad), lambda b, t: (b, t, 0)),
                pl.BlockSpec((kpad, R * hop_pad), lambda b, t: (0, 0),
                             **basis_kwargs),
                pl.BlockSpec((t_tile, hop_pad), lambda b, t: (t, 0)),
            ],
            out_specs=pl.BlockSpec((1, t_tile, hop_pad), lambda b, t: (b, t, 0)),
            scratch_shapes=[
                pltpu.VMEM((t_tile + R - 1, hop_pad), jnp.float32),
                pltpu.VMEM((max(R - 1, 1), hop_pad), jnp.float32),
            ],
            compiler_params=pltpu.CompilerParams(
                dimension_semantics=("parallel", "arbitrary"),
                vmem_limit_bytes=vmem_limit,
            ),
            cost_estimate=cost,
        )

    try:
        out = _build(True)(xcat, basis_dev, env_dev)
    except Exception:
        # pipeline_mode=pl.Buffered(1) unsupported on this jax build; fall back
        # to default double-buffering of the constant basis.
        out = _build(False)(xcat, basis_dev, env_dev)

    # Drop lane padding, flatten OLA rows, apply the center=True trim.
    y = out[:, :, :hop].reshape(B, t_pad * hop)[:, trim:trim + L]
    return y


# ----------------------------------------------------------------------------
# Pure-JAX reference (torch.istft semantics) for a correctness check
# ----------------------------------------------------------------------------
def istft_ref(x, n_fft, hop_length):
    B, freqs, T = x.shape
    window = jnp.asarray(_hamming_periodic(n_fft))
    frames = jnp.fft.irfft(x, n=n_fft, axis=1)            # (B, n_fft, T), real
    frames = frames * window[None, :, None]
    l_full = n_fft + hop_length * (T - 1)
    y = jnp.zeros((B, l_full), jnp.float32)
    env = jnp.zeros((l_full,), jnp.float32)
    for t in range(T):
        s = t * hop_length
        y = y.at[:, s:s + n_fft].add(frames[:, :, t])
        env = env.at[s:s + n_fft].add(window ** 2)
    y = y / env[None, :]
    trim = n_fft // 2
    return y[:, trim:trim + hop_length * (T - 1)]


if __name__ == "__main__":
    n_fft, hop_length, win_length = 16, 4, 16
    B, F = 2, n_fft // 2 + 1

    def make_input(T):
        key = jax.random.PRNGKey(0)
        kr_key, ki_key = jax.random.split(key)
        x_re = jax.random.normal(kr_key, (B, F, T), dtype=jnp.float32)
        x_im = jax.random.normal(ki_key, (B, F, T), dtype=jnp.float32)
        # DC / Nyquist bins of a onesided spectrum carry no imaginary information
        x_im = x_im.at[:, 0, :].set(0.0).at[:, -1, :].set(0.0)
        return (x_re + 1j * x_im).astype(jnp.complex64)

    # 1) small single-tile case (matches the original module usage)
    T1 = 8
    x1 = make_input(T1)
    y1 = jax.block_until_ready(conv_istft(x1, n_fft, hop_length, win_length))
    y1_ref = istft_ref(x1, n_fft, hop_length)
    assert y1.shape == (B, hop_length * (T1 - 1)), y1.shape
    # tolerance sized for bf16 activations + single bf16 MXU pass
    assert jnp.allclose(y1, y1_ref, rtol=1e-2, atol=1e-2), (
        float(jnp.max(jnp.abs(y1 - y1_ref))))

    # 2) multi-tile case: exercises the carried (R-1, hop) overlap tail
    T2 = 40
    x2 = make_input(T2)
    y2 = jax.block_until_ready(
        conv_istft(x2, n_fft, hop_length, win_length, t_tile=16))
    y2_ref = istft_ref(x2, n_fft, hop_length)
    assert y2.shape == (B, hop_length * (T2 - 1)), y2.shape
    assert jnp.allclose(y2, y2_ref, rtol=1e-2, atol=1e-2), (
        float(jnp.max(jnp.abs(y2 - y2_ref))))

    print("KERNEL_OK")
</pallas_src>

<mosaic_0001>
module attributes {stable_mosaic.version = 11 : i64} {
  func.func @kernel(%arg0: i32, %arg1: i32, %arg2: memref<1x16x128xbf16, #tpu.memory_space<vmem>>, %arg3: memref<128x512xbf16, #tpu.memory_space<vmem>>, %arg4: memref<16x128xf32, #tpu.memory_space<vmem>>, %arg5: memref<1x16x128xf32, #tpu.memory_space<vmem>>, %arg6: memref<19x128xf32, #tpu.memory_space<vmem>>, %arg7: memref<3x128xf32, #tpu.memory_space<vmem>>) attributes {dimension_semantics = [#tpu.dimension_semantics<parallel>, #tpu.dimension_semantics<arbitrary>], iteration_bounds = array<i64: 2, 1>, scalar_prefetch = 0 : i64, scratch_operands = 2 : i64, tpu.core_type = #tpu.core_type<tc>, window_params = [{transform_indices = @transform_0, window_bounds = array<i64: 1, 16, 128>}, {pipeline_mode = #tpu.pipeline_mode<synchronous>, transform_indices = @transform_1, window_bounds = array<i64: 128, 512>}, {transform_indices = @transform_2, window_bounds = array<i64: 16, 128>}, {transform_indices = @transform_3, window_bounds = array<i64: 1, 16, 128>}]} {
    %c0 = arith.constant 0 : index
    %c0_0 = arith.constant 0 : index
    %c0_1 = arith.constant 0 : index
    %0 = vector.load %arg2[%c0, %c0_0, %c0_1] : memref<1x16x128xbf16, #tpu.memory_space<vmem>>, vector<1x16x128xbf16>
    %1 = vector.shape_cast %0 : vector<1x16x128xbf16> to vector<16x128xbf16>
    %c0_2 = arith.constant 0 : index
    %c0_3 = arith.constant 0 : index
    %2 = vector.load %arg3[%c0_2, %c0_3] : memref<128x512xbf16, #tpu.memory_space<vmem>>, vector<128x512xbf16>
    %cst = arith.constant dense<0.000000e+00> : vector<16x512xf32>
    %3 = tpu.matmul %1, %2, %cst {dimension_numbers = #tpu.dot_dimension_numbers<[1], [0], [0], [1], [0, 0, 1, 1], [], []>} : vector<16x128xbf16>, vector<128x512xbf16>, vector<16x512xf32> -> vector<16x512xf32>
    %4 = vector.extract_strided_slice %3 {offsets = [0, 0], sizes = [16, 128], strides = [1, 1]} : vector<16x512xf32> to vector<16x128xf32>
    %c0_4 = arith.constant 0 : index
    %c0_5 = arith.constant 0 : index
    %5 = vector.load %arg6[%c0_4, %c0_5] : memref<19x128xf32, #tpu.memory_space<vmem>>, vector<16x128xf32>
    tpu.vector_store %arg6[%c0_4, %c0_5], %4 {strides = array<i32>} : memref<19x128xf32, #tpu.memory_space<vmem>>, vector<16x128xf32>,
    %cst_6 = arith.constant 0.000000e+00 : f32
    %6 = vector.broadcast %cst_6 : f32 to vector<3x128xf32>
    %c16 = arith.constant 16 : index
    %c0_7 = arith.constant 0 : index
    %7 = vector.load %arg6[%c16, %c0_7] : memref<19x128xf32, #tpu.memory_space<vmem>>, vector<3x128xf32>
    tpu.vector_store %arg6[%c16, %c0_7], %6 {strides = array<i32>} : memref<19x128xf32, #tpu.memory_space<vmem>>, vector<3x128xf32>,
    %c1 = arith.constant 1 : index
    %c0_8 = arith.constant 0 : index
    %8 = vector.load %arg6[%c1, %c0_8] : memref<19x128xf32, #tpu.memory_space<vmem>>, vector<16x128xf32>
    %9 = vector.extract_strided_slice %3 {offsets = [0, 128], sizes = [16, 128], strides = [1, 1]} : vector<16x512xf32> to vector<16x128xf32>
    %10 = arith.addf %8, %9 : vector<16x128xf32>
    %c1_9 = arith.constant 1 : index
    %c0_10 = arith.constant 0 : index
    %11 = vector.load %arg6[%c1_9, %c0_10] : memref<19x128xf32, #tpu.memory_space<vmem>>, vector<16x128xf32>
    tpu.vector_store %arg6[%c1_9, %c0_10], %10 {strides = array<i32>} : memref<19x128xf32, #tpu.memory_space<vmem>>, vector<16x128xf32>,
    %c2 = arith.constant 2 : index
    %c0_11 = arith.constant 0 : index
    %12 = vector.load %arg6[%c2, %c0_11] : memref<19x128xf32, #tpu.memory_space<vmem>>, vector<16x128xf32>
    %13 = vector.extract_strided_slice %3 {offsets = [0, 256], sizes = [16, 128], strides = [1, 1]} : vector<16x512xf32> to vector<16x128xf32>
    %14 = arith.addf %12, %13 : vector<16x128xf32>
    %c2_12 = arith.constant 2 : index
    %c0_13 = arith.constant 0 : index
    %15 = vector.load %arg6[%c2_12, %c0_13] : memref<19x128xf32, #tpu.memory_space<vmem>>, vector<16x128xf32>
    tpu.vector_store %arg6[%c2_12, %c0_13], %14 {strides = array<i32>} : memref<19x128xf32, #tpu.memory_space<vmem>>, vector<16x128xf32>,
    %c3 = arith.constant 3 : index
    %c0_14 = arith.constant 0 : index
    %16 = vector.load %arg6[%c3, %c0_14] : memref<19x128xf32, #tpu.memory_space<vmem>>, vector<16x128xf32>
    %17 = vector.extract_strided_slice %3 {offsets = [0, 384], sizes = [16, 128], strides = [1, 1]} : vector<16x512xf32> to vector<16x128xf32>
    %18 = arith.addf %16, %17 : vector<16x128xf32>
    %c3_15 = arith.constant 3 : index
    %c0_16 = arith.constant 0 : index
    %19 = vector.load %arg6[%c3_15, %c0_16] : memref<19x128xf32, #tpu.memory_space<vmem>>, vector<16x128xf32>
    tpu.vector_store %arg6[%c3_15, %c0_16], %18 {strides = array<i32>} : memref<19x128xf32, #tpu.memory_space<vmem>>, vector<16x128xf32>,
    %c0_17 = arith.constant 0 : index
    %c0_18 = arith.constant 0 : index
    %20 = vector.load %arg6[%c0_17, %c0_18] : memref<19x128xf32, #tpu.memory_space<vmem>>, vector<16x128xf32>
    %c0_19 = arith.constant 0 : index
    %c0_20 = arith.constant 0 : index
    %21 = vector.load %arg4[%c0_19, %c0_20] : memref<16x128xf32, #tpu.memory_space<vmem>>, vector<16x128xf32>
    %22 = arith.mulf %20, %21 : vector<16x128xf32>
    %c0_21 = arith.constant 0 : index
    %c0_22 = arith.constant 0 : index
    %c0_23 = arith.constant 0 : index
    %23 = vector.load %arg5[%c0_21, %c0_22, %c0_23] : memref<1x16x128xf32, #tpu.memory_space<vmem>>, vector<1x16x128xf32>
    %24 = vector.shape_cast %23 : vector<1x16x128xf32> to vector<16x128xf32>
    %25 = vector.shape_cast %22 : vector<16x128xf32> to vector<1x16x128xf32>
    tpu.vector_store %arg5[%c0_21, %c0_22, %c0_23], %25 {strides = array<i32>} : memref<1x16x128xf32, #tpu.memory_space<vmem>>, vector<1x16x128xf32>,
    return
  }
  func.func @transform_0(%arg0: i32, %arg1: i32) -> (i32, i32, i32) {
    %c0_i32 = arith.constant 0 : i32
    %c0_i32_0 = arith.constant 0 : i32
    return %arg0, %arg1, %c0_i32 : i32, i32, i32
  }
  func.func @transform_1(%arg0: i32, %arg1: i32) -> (i32, i32) {
    %c0_i32 = arith.constant 0 : i32
    %c0_i32_0 = arith.constant 0 : i32
    %c0_i32_1 = arith.constant 0 : i32
    return %c0_i32, %c0_i32_0 : i32, i32
  }
  func.func @transform_2(%arg0: i32, %arg1: i32) -> (i32, i32) {
    %c0_i32 = arith.constant 0 : i32
    %c0_i32_0 = arith.constant 0 : i32
    return %arg1, %c0_i32 : i32, i32
  }
  func.func @transform_3(%arg0: i32, %arg1: i32) -> (i32, i32, i32) {
    %c0_i32 = arith.constant 0 : i32
    %c0_i32_0 = arith.constant 0 : i32
    return %arg0, %arg1, %c0_i32 : i32, i32, i32
  }
}

module attributes {stable_mosaic.version = 11 : i64} {
  func.func @kernel(%arg0: i32, %arg1: i32, %arg2: memref<1x16x128xbf16, #tpu.memory_space<vmem>>, %arg3: memref<128x512xbf16, #tpu.memory_space<vmem>>, %arg4: memref<16x128xf32, #tpu.memory_space<vmem>>, %arg5: memref<1x16x128xf32, #tpu.memory_space<vmem>>, %arg6: memref<19x128xf32, #tpu.memory_space<vmem>>, %arg7: memref<3x128xf32, #tpu.memory_space<vmem>>) attributes {dimension_semantics = [#tpu.dimension_semantics<parallel>, #tpu.dimension_semantics<arbitrary>], iteration_bounds = array<i64: 2, 1>, scalar_prefetch = 0 : i64, scratch_operands = 2 : i64, tpu.core_type = #tpu.core_type<tc>, window_params = [{transform_indices = @transform_0, window_bounds = array<i64: 1, 16, 128>}, {pipeline_mode = #tpu.pipeline_mode<synchronous>, transform_indices = @transform_1, window_bounds = array<i64: 128, 512>}, {transform_indices = @transform_2, window_bounds = array<i64: 16, 128>}, {transform_indices = @transform_3, window_bounds = array<i64: 1, 16, 128>}]} {
    %c0 = arith.constant 0 : index
    %c0_0 = arith.constant 0 : index
    %c0_1 = arith.constant 0 : index
    %0 = vector.load %arg2[%c0, %c0_0, %c0_1] : memref<1x16x128xbf16, #tpu.memory_space<vmem>>, vector<1x16x128xbf16>
    %1 = vector.shape_cast %0 : vector<1x16x128xbf16> to vector<16x128xbf16>
    %c0_2 = arith.constant 0 : index
    %c0_3 = arith.constant 0 : index
    %2 = vector.load %arg3[%c0_2, %c0_3] : memref<128x512xbf16, #tpu.memory_space<vmem>>, vector<128x512xbf16>
    %cst = arith.constant dense<0.000000e+00> : vector<16x512xf32>
    %3 = tpu.matmul %1, %2, %cst {dimension_numbers = #tpu.dot_dimension_numbers<[1], [0], [0], [1], [0, 0, 1, 1], [], []>} : vector<16x128xbf16>, vector<128x512xbf16>, vector<16x512xf32> -> vector<16x512xf32>
    %4 = vector.extract_strided_slice %3 {offsets = [0, 0], sizes = [16, 128], strides = [1, 1]} : vector<16x512xf32> to vector<16x128xf32>
    %c0_4 = arith.constant 0 : index
    %c0_5 = arith.constant 0 : index
    %5 = vector.load %arg6[%c0_4, %c0_5] : memref<19x128xf32, #tpu.memory_space<vmem>>, vector<16x128xf32>
    tpu.vector_store %arg6[%c0_4, %c0_5], %4 {strides = array<i32>} : memref<19x128xf32, #tpu.memory_space<vmem>>, vector<16x128xf32>,
    %cst_6 = arith.constant 0.000000e+00 : f32
    %6 = vector.broadcast %cst_6 : f32 to vector<3x128xf32>
    %c16 = arith.constant 16 : index
    %c0_7 = arith.constant 0 : index
    %7 = vector.load %arg6[%c16, %c0_7] : memref<19x128xf32, #tpu.memory_space<vmem>>, vector<3x128xf32>
    tpu.vector_store %arg6[%c16, %c0_7], %6 {strides = array<i32>} : memref<19x128xf32, #tpu.memory_space<vmem>>, vector<3x128xf32>,
    %c1 = arith.constant 1 : index
    %c0_8 = arith.constant 0 : index
    %8 = vector.load %arg6[%c1, %c0_8] : memref<19x128xf32, #tpu.memory_space<vmem>>, vector<16x128xf32>
    %9 = vector.extract_strided_slice %3 {offsets = [0, 128], sizes = [16, 128], strides = [1, 1]} : vector<16x512xf32> to vector<16x128xf32>
    %10 = arith.addf %8, %9 : vector<16x128xf32>
    %c1_9 = arith.constant 1 : index
    %c0_10 = arith.constant 0 : index
    %11 = vector.load %arg6[%c1_9, %c0_10] : memref<19x128xf32, #tpu.memory_space<vmem>>, vector<16x128xf32>
    tpu.vector_store %arg6[%c1_9, %c0_10], %10 {strides = array<i32>} : memref<19x128xf32, #tpu.memory_space<vmem>>, vector<16x128xf32>,
    %c2 = arith.constant 2 : index
    %c0_11 = arith.constant 0 : index
    %12 = vector.load %arg6[%c2, %c0_11] : memref<19x128xf32, #tpu.memory_space<vmem>>, vector<16x128xf32>
    %13 = vector.extract_strided_slice %3 {offsets = [0, 256], sizes = [16, 128], strides = [1, 1]} : vector<16x512xf32> to vector<16x128xf32>
    %14 = arith.addf %12, %13 : vector<16x128xf32>
    %c2_12 = arith.constant 2 : index
    %c0_13 = arith.constant 0 : index
    %15 = vector.load %arg6[%c2_12, %c0_13] : memref<19x128xf32, #tpu.memory_space<vmem>>, vector<16x128xf32>
    tpu.vector_store %arg6[%c2_12, %c0_13], %14 {strides = array<i32>} : memref<19x128xf32, #tpu.memory_space<vmem>>, vector<16x128xf32>,
    %c3 = arith.constant 3 : index
    %c0_14 = arith.constant 0 : index
    %16 = vector.load %arg6[%c3, %c0_14] : memref<19x128xf32, #tpu.memory_space<vmem>>, vector<16x128xf32>
    %17 = vector.extract_strided_slice %3 {offsets = [0, 384], sizes = [16, 128], strides = [1, 1]} : vector<16x512xf32> to vector<16x128xf32>
    %18 = arith.addf %16, %17 : vector<16x128xf32>
    %c3_15 = arith.constant 3 : index
    %c0_16 = arith.constant 0 : index
    %19 = vector.load %arg6[%c3_15, %c0_16] : memref<19x128xf32, #tpu.memory_space<vmem>>, vector<16x128xf32>
    tpu.vector_store %arg6[%c3_15, %c0_16], %18 {strides = array<i32>} : memref<19x128xf32, #tpu.memory_space<vmem>>, vector<16x128xf32>,
    %c0_17 = arith.constant 0 : index
    %c0_18 = arith.constant 0 : index
    %20 = vector.load %arg6[%c0_17, %c0_18] : memref<19x128xf32, #tpu.memory_space<vmem>>, vector<16x128xf32>
    %c0_19 = arith.constant 0 : index
    %c0_20 = arith.constant 0 : index
    %21 = vector.load %arg4[%c0_19, %c0_20] : memref<16x128xf32, #tpu.memory_space<vmem>>, vector<16x128xf32>
    %22 = arith.mulf %20, %21 : vector<16x128xf32>
    %c0_21 = arith.constant 0 : index
    %c0_22 = arith.constant 0 : index
    %c0_23 = arith.constant 0 : index
    %23 = vector.load %arg5[%c0_21, %c0_22, %c0_23] : memref<1x16x128xf32, #tpu.memory_space<vmem>>, vector<1x16x128xf32>
    %24 = vector.shape_cast %23 : vector<1x16x128xf32> to vector<16x128xf32>
    %25 = vector.shape_cast %22 : vector<16x128xf32> to vector<1x16x128xf32>
    tpu.vector_store %arg5[%c0_21, %c0_22, %c0_23], %25 {strides = array<i32>} : memref<1x16x128xf32, #tpu.memory_space<vmem>>, vector<1x16x128xf32>,
    return
  }
  func.func @transform_0(%arg0: i32, %arg1: i32) -> (i32, i32, i32) {
    %c0_i32 = arith.constant 0 : i32
    %c0_i32_0 = arith.constant 0 : i32
    return %arg0, %arg1, %c0_i32 : i32, i32, i32
  }
  func.func @transform_1(%arg0: i32, %arg1: i32) -> (i32, i32) {
    %c0_i32 = arith.constant 0 : i32
    %c0_i32_0 = arith.constant 0 : i32
    %c0_i32_1 = arith.constant 0 : i32
    return %c0_i32, %c0_i32_0 : i32, i32
  }
  func.func @transform_2(%arg0: i32, %arg1: i32) -> (i32, i32) {
    %c0_i32 = arith.constant 0 : i32
    %c0_i32_0 = arith.constant 0 : i32
    return %arg1, %c0_i32 : i32, i32
  }
  func.func @transform_3(%arg0: i32, %arg1: i32) -> (i32, i32, i32) {
    %c0_i32 = arith.constant 0 : i32
    %c0_i32_0 = arith.constant 0 : i32
    return %arg0, %arg1, %c0_i32 : i32, i32, i32
  }
}

</mosaic_0001>

<llo_original>
// kernel: tpu_custom_call.1
$region0: #{tpu_custom_call.1}
  #allocation0 [shape = 'u32[]', space=smem, size = 0x4, offset = 0x4, fixed_abs, tag = 'smem constant byte address 0x4 - core index']
  #allocation1 [shape = 'u32[144,128]{1,0:T(1,128)}', space=vmem, size = 0x12000, scoped, tag = 'internal scratch']
  #allocation2 [shape = 'f32[19,128]{1,0:T(8,128)}', space=vmem, size = 0x3000, scoped, tag = 'scratch operand']
  #allocation3 [shape = 'f32[3,128]{1,0:T(4,128)}', space=vmem, size = 0x800, scoped, tag = 'scratch operand']
  %s0 = inlined_call_operand.hbm [shape: bf16[2,16,128], index: 0, kind: input, shape index: {}]
  %s1 = inlined_call_operand.hbm [shape: bf16[128,512], index: 1, kind: input, shape index: {}]
  %s2 = inlined_call_operand.hbm [shape: f32[16,128], index: 2, kind: input, shape index: {}]
  %s3 = inlined_call_operand.hbm [shape: f32[2,16,128], index: 3, kind: output, shape index: {}]
  %s4 = sld [smem:[#allocation0]]
  $region57: #{tpu_custom_call.1} parent=0
    _
  %s6 = ssub.s32 1, %s4
  %s7 = scalar_select 0, %s6, %s4
  $region1: #{tpu_custom_call.1} parent=0
    #allocation4 [shape = 'u8[8192]{0}', space=vmem, size = 0x2000, scoped, tag = 'input window, operand 0']
    #allocation5 [shape = 's32[2]{0}', space=sflag, size = 0x8, scoped, tag = 'scoped memory for tpu_custom_call.1']
    #allocation6 [shape = 's32[2]{0}', space=sflag, size = 0x8, scoped, tag = 'scoped memory for tpu_custom_call.1']
    #allocation7 [shape = 'u8[131072]{0}', space=vmem, size = 0x20000, scoped, tag = 'input window, operand 1, single buffered']
    #allocation8 [shape = 's32[1]{0}', space=sflag, size = 0x4, scoped, tag = 'scoped memory for tpu_custom_call.1']
    #allocation9 [shape = 'u8[8192]{0}', space=vmem, size = 0x2000, scoped, tag = 'input window, operand 2, single buffered']
    #allocation10 [shape = 'u8[16384]{0}', space=vmem, size = 0x4000, scoped, tag = 'output window, operand 0']
    %8 = vsyncpa [#allocation5], 0
    %s9 = scalar_lea.sflag [#allocation5], 1
    %10 = vsyncpa %s9, 0
    %11 = vsyncpa [#allocation8], 0
    %12 = vsyncpa [#allocation6], 0
    %s13 = scalar_lea.sflag [#allocation6], 1
    %14 = vsyncpa %s13, 0
    loop: start=0, step=1, limit=4
    $region2: #{tpu_custom_call.1} parent=1 // loop_pre_header
      _
    $region3: #{tpu_custom_call.1} parent=1 // loop_header
      %s16 = sphi 0, %s20
      %p17 = scmp.ge.s32.totalorder %s16, 4
      %s23 = sphi 0, %s35
      %s24 = sphi 0, %s31
      %s25 = sphi 0, %s23
      %s26 = sphi 0, %s24
      %s27 = sphi 0, %s25
      %s28 = sphi 0, %s26
      %s40 = sphi 0, %s42
      %s43 = sphi 0, %s40
      %s44 = sphi 0, %s43
      %s60 = sphi 0, %s44
      %s64 = sphi 0, %s64
      %s66 = sphi 0, %s64
      %s67 = sphi 0, %s66
      %s81 = sphi 0, %s67
      %s87 = sphi 0, %s89
      %s90 = sphi 0, %s87
      %s91 = sphi 0, %s90
      %s107 = sphi 0, %s91
      %s115 = sphi 0, %s117
      %s118 = sphi 0, %s115
      %s119 = sphi 0, %s118
      %s135 = sphi 0, %s119
    $region4: #{tpu_custom_call.1} parent=1 // loop_header_branch
      %19 = sbr.rel (%p17) target = $region8
    $region5: #{tpu_custom_call.1} parent=1 // loop_body
      %s21 = ssub.s32 %s16, 1
      %s22 = ssub.s32 %s16, 2
      %s29 = sadd.s32 1, %s24
      %p30 = scmp.ge.s32.totalorder %s29, 1
      %s31 = scalar_select %p30, 0, %s29
      %s32 = sadd.s32 1, %s23
      %s33 = scalar_select %p30, %s32, %s23
      %p34 = scmp.ge.s32.totalorder %s33, 2
      %s35 = scalar_select %p34, 0, %s33
      %s36 = ssub.s32 %s23, %s35
      %s37 = ssub.s32 %s24, %s31
      %s38 = sor.u32 %s36, %s37
      %p39 = scmp.eq.s32.totalorder %s38, 0
      %s41 = sadd.s32 %s40, 1
      %s42 = scalar_select %p39, %s40, %s41
      %p45 = pneg %p39
      %p46 = scmp.eq.s32.totalorder %s16, 1
      %p47 = por %p45, %p46
      %p48 = scmp.ne.s32.totalorder %s40, %s43
      %p49 = scmp.eq.s32.totalorder %s16, 0
      %p50 = por %p48, %p49
      %p51 = scmp.ne.s32.totalorder %s40, %s43
      %p52 = scmp.eq.s32.totalorder %s21, 1
      %p53 = por %p51, %p52
      %p54 = scmp.ne.s32.totalorder %s43, %s44
      %p55 = scmp.eq.s32.totalorder %s21, 0
      %p56 = por %p54, %p55
      %p57 = scmp.ne.s32.totalorder %s43, %s44
      %p58 = scmp.eq.s32.totalorder %s22, 1
      %p59 = por %p57, %p58
      %p61 = scmp.ne.s32.totalorder %s44, %s60
      %p62 = scmp.eq.s32.totalorder %s22, 0
      %p63 = por %p61, %p62
      %s65 = sadd.s32 %s64, 1
      %p68 = scmp.eq.s32.totalorder %s16, 1
      %p69 = scmp.ne.s32.totalorder %s64, %s66
      %p70 = scmp.eq.s32.totalorder %s16, 0
      %p71 = por %p69, %p70
      %p72 = scmp.ne.s32.totalorder %s64, %s66
      %p73 = scmp.eq.s32.totalorder %s21, 1
      %p74 = por %p72, %p73
      %p75 = scmp.ne.s32.totalorder %s66, %s67
      %p76 = scmp.eq.s32.totalorder %s21, 0
      %p77 = por %p75, %p76
      %p78 = scmp.ne.s32.totalorder %s66, %s67
      %p79 = scmp.eq.s32.totalorder %s22, 1
      %p80 = por %p78, %p79
      %p82 = scmp.ne.s32.totalorder %s67, %s81
      %p83 = scmp.eq.s32.totalorder %s22, 0
      %p84 = por %p82, %p83
      %s85 = ssub.s32 %s24, %s31
      %p86 = scmp.eq.s32.totalorder %s85, 0
      %s88 = sadd.s32 %s87, 1
      %s89 = scalar_select %p86, %s87, %s88
      %p92 = pneg %p86
      %p93 = scmp.eq.s32.totalorder %s16, 1
      %p94 = por %p92, %p93
      %p95 = scmp.ne.s32.totalorder %s87, %s90
      %p96 = scmp.eq.s32.totalorder %s16, 0
      %p97 = por %p95, %p96
      %p98 = scmp.ne.s32.totalorder %s87, %s90
      %p99 = scmp.eq.s32.totalorder %s21, 1
      %p100 = por %p98, %p99
      %p101 = scmp.ne.s32.totalorder %s90, %s91
      %p102 = scmp.eq.s32.totalorder %s21, 0
      %p103 = por %p101, %p102
      %p104 = scmp.ne.s32.totalorder %s90, %s91
      %p105 = scmp.eq.s32.totalorder %s22, 1
      %p106 = por %p104, %p105
      %p108 = scmp.ne.s32.totalorder %s91, %s107
      %p109 = scmp.eq.s32.totalorder %s22, 0
      %p110 = por %p108, %p109
      %s111 = ssub.s32 %s23, %s35
      %s112 = ssub.s32 %s24, %s31
      %s113 = sor.u32 %s111, %s112
      %p114 = scmp.eq.s32.totalorder %s113, 0
      %s116 = sadd.s32 %s115, 1
      %s117 = scalar_select %p114, %s115, %s116
      %p120 = pneg %p114
      %p121 = scmp.eq.s32.totalorder %s16, 1
      %p122 = por %p120, %p121
      %p123 = scmp.ne.s32.totalorder %s115, %s118
      %p124 = scmp.eq.s32.totalorder %s16, 0
      %p125 = por %p123, %p124
      %p126 = scmp.ne.s32.totalorder %s115, %s118
      %p127 = scmp.eq.s32.totalorder %s21, 1
      %p128 = por %p126, %p127
      %p129 = scmp.ne.s32.totalorder %s118, %s119
      %p130 = scmp.eq.s32.totalorder %s21, 0
      %p131 = por %p129, %p130
      %p132 = scmp.ne.s32.totalorder %s118, %s119
      %p133 = scmp.eq.s32.totalorder %s22, 1
      %p134 = por %p132, %p133
      %p136 = scmp.ne.s32.totalorder %s119, %s135
      %p137 = scmp.eq.s32.totalorder %s22, 0
      %p138 = por %p136, %p137
      %p139 = scmp.le.s32.totalorder 1, %s16
      %p140 = scmp.lt.s32.totalorder %s16, 3
      %p141 = pnand %p139, %p140
      %p142 = pneg %p141
      // Predicated region
      $region9: #{tpu_custom_call.1} parent=5 // pred_check
        _
      $region10: #{tpu_custom_call.1} parent=5 // pred_check_branch
        %144 = sbr.rel (%p141) target = $region12
      $region11: #{tpu_custom_call.1} parent=5 // pred_region
        %s145 = ssub.s32 %s16, 1
        // Predicated region
        $region13: #{tpu_custom_call.1} parent=11 // pred_check
          %p146 = pneg %p77
        $region14: #{tpu_custom_call.1} parent=11 // pred_check_branch
          %148 = sbr.rel (%p146) target = $region16
        $region15: #{tpu_custom_call.1} parent=11 // pred_region
          %s150 = ssub.s32 4096, 4096
          %151 = vsyncadd [#allocation8], %s150
          %s152 = sshll.u32 [#allocation7], 4
          %s153 = int_to_ptr.vmem [resolvable:$true] %s152
          %158 = dma.hbm_to_vmem [thread:$0]  %s1, 4096, %s153, [#allocation8], 256, 256, 16
        $region16: #{tpu_custom_call.1} parent=11 // pred_fallthru
          _
        // Predicated region
        $region17: #{tpu_custom_call.1} parent=11 // pred_check
          %p159 = pneg %p103
        $region18: #{tpu_custom_call.1} parent=11 // pred_check_branch
          %161 = sbr.rel (%p159) target = $region20
        $region19: #{tpu_custom_call.1} parent=11 // pred_region
          %s162 = smul.u32 2, %s26
          %s164 = ssub.s32 256, 256
          %165 = vsyncadd [#allocation8], %s164
          %s166 = smul.addr %s162, 128
          %s167 = scalar_lea.hbm %s2, %s166
          %s168 = sshll.u32 [#allocation9], 4
          %s169 = int_to_ptr.vmem [resolvable:$true] %s168
          %174 = dma.hbm_to_vmem [thread:$0]  %s167, 256, %s169, [#allocation8], 128, 128, 8
        $region20: #{tpu_custom_call.1} parent=11 // pred_fallthru
          _
      $region12: #{tpu_custom_call.1} parent=5 // pred_fallthru
        _
      %p175 = scmp.lt.s32.totalorder %s16, 2
      // Predicated region
      $region21: #{tpu_custom_call.1} parent=5 // pred_check
        %p176 = pneg %p175
      $region22: #{tpu_custom_call.1} parent=5 // pred_check_branch
        %178 = sbr.rel (%p176) target = $region24
      $region23: #{tpu_custom_call.1} parent=5 // pred_region
        // Predicated region
        $region25: #{tpu_custom_call.1} parent=23 // pred_check
          %p179 = pneg %p50
        $region26: #{tpu_custom_call.1} parent=23 // pred_check_branch
          %181 = sbr.rel (%p179) target = $region28
        $region27: #{tpu_custom_call.1} parent=23 // pred_region
          %s182 = sand.u32 %s40, 1
          %s183 = scalar_lea.sflag [#allocation5], %s182
          %s184 = sand.u32 %s40, 1
          %s185 = smul.addr %s184, 8
          %s186 = scalar_lea.vmem [#allocation4], %s185
          %s187 = smul.u32 2, %s24
          %s189 = ssub.s32 128, 128
          %190 = vsyncadd %s183, %s189
          %s191 = smul.addr %s23, 2
          %s192 = sadd.s32 %s187, %s191
          %s193 = smul.addr %s192, 64
          %s194 = scalar_lea.hbm %s0, %s193
          %s195 = sshll.u32 %s186, 4
          %s196 = int_to_ptr.vmem [resolvable:$true] %s195
          %201 = dma.hbm_to_vmem [thread:$0]  %s194, 128, %s196, %s183, 64, 64, 4
        $region28: #{tpu_custom_call.1} parent=23 // pred_fallthru
          _
      $region24: #{tpu_custom_call.1} parent=5 // pred_fallthru
        _
      %p202 = scmp.le.s32.totalorder 1, %s16
      %p203 = scmp.lt.s32.totalorder %s16, 3
      %p204 = pnand %p202, %p203
      %p205 = pneg %p204
      // Predicated region
      $region29: #{tpu_custom_call.1} parent=5 // pred_check
        _
      $region30: #{tpu_custom_call.1} parent=5 // pred_check_branch
        %207 = sbr.rel (%p204) target = $region32
      $region31: #{tpu_custom_call.1} parent=5 // pred_region
        %s208 = ssub.s32 %s16, 1
        %s209 = sand.u32 %s43, 1
        %s210 = scalar_lea.sflag [#allocation5], %s209
        %s211 = sand.u32 %s43, 1
        %s212 = smul.addr %s211, 8
        %s213 = scalar_lea.vmem [#allocation4], %s212
        // Predicated region
        $region33: #{tpu_custom_call.1} parent=31 // pred_check
          %p214 = pneg %p56
        $region34: #{tpu_custom_call.1} parent=31 // pred_check_branch
          %216 = sbr.rel (%p214) target = $region36
        $region35: #{tpu_custom_call.1} parent=31 // pred_region
          %217 = dma.done %s210, 128
        $region36: #{tpu_custom_call.1} parent=31 // pred_fallthru
          _
        // Predicated region
        $region37: #{tpu_custom_call.1} parent=31 // pred_check
          %p218 = pneg %p77
        $region38: #{tpu_custom_call.1} parent=31 // pred_check_branch
          %220 = sbr.rel (%p218) target = $region40
        $region39: #{tpu_custom_call.1} parent=31 // pred_region
          %221 = dma.done [#allocation8], 4096
        $region40: #{tpu_custom_call.1} parent=31 // pred_fallthru
          _
        // Predicated region
        $region41: #{tpu_custom_call.1} parent=31 // pred_check
          %p222 = pneg %p103
        $region42: #{tpu_custom_call.1} parent=31 // pred_check_branch
          %224 = sbr.rel (%p222) target = $region44
        $region43: #{tpu_custom_call.1} parent=31 // pred_region
          %225 = dma.done [#allocation8], 256
        $region44: #{tpu_custom_call.1} parent=31 // pred_fallthru
          _
        %s226 = sand.u32 %s43, 1
        %s227 = scalar_lea.sflag [#allocation5], %s226
        %s228 = sand.u32 %s43, 1
        %s229 = smul.addr %s228, 8
        %s230 = scalar_lea.vmem [#allocation4], %s229
        %p231 = pneg %p56
        %p232 = pneg %p53
        %p233 = pneg %p77
        %p234 = pneg %p74
        %p235 = pneg %p103
        %p236 = pneg %p100
        %p237 = pneg %p131
        %p238 = pneg %p128
        %s239 = sand.u32 %s118, 1
        %s240 = scalar_lea.sflag [#allocation6], %s239
        %s241 = sand.u32 %s118, 1
        %s242 = smul.addr %s241, 16
        %s243 = scalar_lea.vmem [#allocation10], %s242
        %s244 = smul.u32 2, %s26
        %s245 = smul.u32 2, %s26
        %s246 = smul.u32 2, %s26
        %v248 = vld [vmem:[%s213] sm:$0xf]
        %v249 = vld [vmem:[%s213 + $0x4] sm:$0xf]
        %v250 = vld [vmem:[#allocation7] sm:$0xff]
        %v251 = vld [vmem:[#allocation7 + $0x8] sm:$0xff]
        %v252 = vld [vmem:[#allocation7 + $0x10] sm:$0xff]
        %v253 = vld [vmem:[#allocation7 + $0x18] sm:$0xff]
        %v254 = vld [vmem:[#allocation7 + $0x20] sm:$0xff]
        %v255 = vld [vmem:[#allocation7 + $0x28] sm:$0xff]
        %v256 = vld [vmem:[#allocation7 + $0x30] sm:$0xff]
        %v257 = vld [vmem:[#allocation7 + $0x38] sm:$0xff]
        %v258 = vld [vmem:[#allocation7 + $0x40] sm:$0xff]
        %v259 = vld [vmem:[#allocation7 + $0x48] sm:$0xff]
        %v260 = vld [vmem:[#allocation7 + $0x50] sm:$0xff]
        %v261 = vld [vmem:[#allocation7 + $0x58] sm:$0xff]
        %v262 = vld [vmem:[#allocation7 + $0x60] sm:$0xff]
        %v263 = vld [vmem:[#allocation7 + $0x68] sm:$0xff]
        %v264 = vld [vmem:[#allocation7 + $0x70] sm:$0xff]
        %v265 = vld [vmem:[#allocation7 + $0x78] sm:$0xff]
        %v266 = vld [vmem:[#allocation7 + $0x80] sm:$0xff]
        %v267 = vld [vmem:[#allocation7 + $0x88] sm:$0xff]
        %v268 = vld [vmem:[#allocation7 + $0x90] sm:$0xff]
        %v269 = vld [vmem:[#allocation7 + $0x98] sm:$0xff]
        %v270 = vld [vmem:[#allocation7 + $0xa0] sm:$0xff]
        %v271 = vld [vmem:[#allocation7 + $0xa8] sm:$0xff]
        %v272 = vld [vmem:[#allocation7 + $0xb0] sm:$0xff]
        %v273 = vld [vmem:[#allocation7 + $0xb8] sm:$0xff]
        %v274 = vld [vmem:[#allocation7 + $0xc0] sm:$0xff]
        %v275 = vld [vmem:[#allocation7 + $0xc8] sm:$0xff]
        %v276 = vld [vmem:[#allocation7 + $0xd0] sm:$0xff]
        %v277 = vld [vmem:[#allocation7 + $0xd8] sm:$0xff]
        %v278 = vld [vmem:[#allocation7 + $0xe0] sm:$0xff]
        %v279 = vld [vmem:[#allocation7 + $0xe8] sm:$0xff]
        %v280 = vld [vmem:[#allocation7 + $0xf0] sm:$0xff]
        %v281 = vld [vmem:[#allocation7 + $0xf8] sm:$0xff]
        %v284 = vunpack.c.l.b16 %v248
        %v285 = vunpack.c.l.b16 %v249
        %v286 = vpack.c.b16 %v285, %v284
        %v320 = vunpack.c.l.b16 %v250
        %v321 = vunpack.c.h.b16 %v250
        %v322 = vunpack.c.l.b16 %v251
        %v323 = vunpack.c.h.b16 %v251
        %v324 = vunpack.c.l.b16 %v252
        %v325 = vunpack.c.h.b16 %v252
        %v326 = vunpack.c.l.b16 %v253
        %v327 = vunpack.c.h.b16 %v253
        %v328 = vunpack.c.l.b16 %v254
        %v329 = vunpack.c.h.b16 %v254
        %v330 = vunpack.c.l.b16 %v255
        %v331 = vunpack.c.h.b16 %v255
        %v332 = vunpack.c.l.b16 %v256
        %v333 = vunpack.c.h.b16 %v256
        %v334 = vunpack.c.l.b16 %v257
        %v335 = vunpack.c.h.b16 %v257
        %v336 = vunpack.c.l.b16 %v258
        %v337 = vunpack.c.h.b16 %v258
        %v338 = vunpack.c.l.b16 %v259
        %v339 = vunpack.c.h.b16 %v259
        %v340 = vunpack.c.l.b16 %v260
        %v341 = vunpack.c.h.b16 %v260
        %v342 = vunpack.c.l.b16 %v261
        %v343 = vunpack.c.h.b16 %v261
        %v344 = vunpack.c.l.b16 %v262
        %v345 = vunpack.c.h.b16 %v262
        %v346 = vunpack.c.l.b16 %v263
        %v347 = vunpack.c.h.b16 %v263
        %v348 = vunpack.c.l.b16 %v264
        %v349 = vunpack.c.h.b16 %v264
        %v350 = vunpack.c.l.b16 %v265
        %v351 = vunpack.c.h.b16 %v265
        %v352 = vunpack.c.l.b16 %v266
        %v353 = vunpack.c.h.b16 %v266
        %v354 = vunpack.c.l.b16 %v267
        %v355 = vunpack.c.h.b16 %v267
        %v356 = vunpack.c.l.b16 %v268
        %v357 = vunpack.c.h.b16 %v268
        %v358 = vunpack.c.l.b16 %v269
        %v359 = vunpack.c.h.b16 %v269
        %v360 = vunpack.c.l.b16 %v270
        %v361 = vunpack.c.h.b16 %v270
        %v362 = vunpack.c.l.b16 %v271
        %v363 = vunpack.c.h.b16 %v271
        %v364 = vunpack.c.l.b16 %v272
        %v365 = vunpack.c.h.b16 %v272
        %v366 = vunpack.c.l.b16 %v273
        %v367 = vunpack.c.h.b16 %v273
        %v368 = vunpack.c.l.b16 %v274
        %v369 = vunpack.c.h.b16 %v274
        %v370 = vunpack.c.l.b16 %v275
        %v371 = vunpack.c.h.b16 %v275
        %v372 = vunpack.c.l.b16 %v276
        %v373 = vunpack.c.h.b16 %v276
        %v374 = vunpack.c.l.b16 %v277
        %v375 = vunpack.c.h.b16 %v277
        %v376 = vunpack.c.l.b16 %v278
        %v377 = vunpack.c.h.b16 %v278
        %v378 = vunpack.c.l.b16 %v279
        %v379 = vunpack.c.h.b16 %v279
        %v380 = vunpack.c.l.b16 %v280
        %v381 = vunpack.c.h.b16 %v280
        %v382 = vunpack.c.l.b16 %v281
        %v383 = vunpack.c.h.b16 %v281
        %v384 = vpack.c.b16 %v324, %v320
        %v385 = vpack.c.b16 %v325, %v321
        %v386 = vpack.c.b16 %v326, %v322
        %v387 = vpack.c.b16 %v327, %v323
        %v388 = vpack.c.b16 %v332, %v328
        %v389 = vpack.c.b16 %v333, %v329
        %v390 = vpack.c.b16 %v334, %v330
        %v391 = vpack.c.b16 %v335, %v331
        %v392 = vpack.c.b16 %v340, %v336
        %v393 = vpack.c.b16 %v341, %v337
        %v394 = vpack.c.b16 %v342, %v338
        %v395 = vpack.c.b16 %v343, %v339
        %v396 = vpack.c.b16 %v348, %v344
        %v397 = vpack.c.b16 %v349, %v345
        %v398 = vpack.c.b16 %v350, %v346
        %v399 = vpack.c.b16 %v351, %v347
        %v400 = vpack.c.b16 %v356, %v352
        %v401 = vpack.c.b16 %v357, %v353
        %v402 = vpack.c.b16 %v358, %v354
        %v403 = vpack.c.b16 %v359, %v355
        %v404 = vpack.c.b16 %v364, %v360
        %v405 = vpack.c.b16 %v365, %v361
        %v406 = vpack.c.b16 %v366, %v362
        %v407 = vpack.c.b16 %v367, %v363
        %v408 = vpack.c.b16 %v372, %v368
        %v409 = vpack.c.b16 %v373, %v369
        %v410 = vpack.c.b16 %v374, %v370
        %v411 = vpack.c.b16 %v375, %v371
        %v412 = vpack.c.b16 %v380, %v376
        %v413 = vpack.c.b16 %v381, %v377
        %v414 = vpack.c.b16 %v382, %v378
        %v415 = vpack.c.b16 %v383, %v379
        %448 = vmatprep.subr.bf16.mxu0 %v413
        %449 = vmatpush1.bf16.msra.mxu0 %v412
        %450 = vmatprep.subr.bf16.mxu0 %v409
        %451 = vmatpush1.bf16.msra.mxu0 %v408
        %452 = vmatprep.subr.bf16.mxu0 %v405
        %453 = vmatpush1.bf16.msra.mxu0 %v404
        %454 = vmatprep.subr.bf16.mxu0 %v401
        %455 = vmatpush1.bf16.msra.mxu0 %v400
        %456 = vmatprep.subr.bf16.mxu0 %v397
        %457 = vmatpush1.bf16.msra.mxu0 %v396
        %458 = vmatprep.subr.bf16.mxu0 %v393
        %459 = vmatpush1.bf16.msra.mxu0 %v392
        %460 = vmatprep.subr.bf16.mxu0 %v389
        %461 = vmatpush1.bf16.msra.mxu0 %v388
        %462 = vmatprep.subr.bf16.mxu0 %v385
        %463 = vmatpush1.bf16.msra.mxu0 %v384
        %464 = vmatprep.subr.bf16.mxu0 0
        %465 = vmatpush2.bf16.msra.mxu0 0
        %466 = vmatprep.subr.bf16.mxu0 0
        %467 = vmatpush2.bf16.msra.mxu0 0
        %468 = vmatprep.subr.bf16.mxu0 0
        %469 = vmatpush2.bf16.msra.mxu0 0
        %470 = vmatprep.subr.bf16.mxu0 0
        %471 = vmatpush2.bf16.msra.mxu0 0
        %472 = vmatprep.subr.bf16.mxu0 0
        %473 = vmatpush2.bf16.msra.mxu0 0
        %474 = vmatprep.subr.bf16.mxu0 0
        %475 = vmatpush2.bf16.msra.mxu0 0
        %476 = vmatprep.subr.bf16.mxu0 0
        %477 = vmatpush2.bf16.msra.mxu0 0
        %478 = vmatprep.subr.bf16.mxu0 0
        %479 = vmatpush2.bf16.msra.mxu0 0
        %480 = vmatprep.mubr.bf16.mxu0 0
        %481 = vmatmul.mubr.bf16.gmra.mxu0 %v286
        %v482 = vpop.f32.mrf.mxu0
        %v483 = vadd.f32 0.0, %v482
        %v484 = vpop.f32.mrf.mxu0
        %v485 = vadd.f32 0.0, %v484
        %v486 = vpop.f32.mrf.mxu0
        %v487 = vadd.f32 0.0, %v486
        %v488 = vpop.f32.mrf.mxu0
        %v489 = vadd.f32 0.0, %v488
        %490 = vdwg.mxu0
        %491 = vmatprep.subr.bf16.mxu0 %v415
        %492 = vmatpush1.bf16.msra.mxu0 %v414
        %493 = vmatprep.subr.bf16.mxu0 %v411
        %494 = vmatpush1.bf16.msra.mxu0 %v410
        %495 = vmatprep.subr.bf16.mxu0 %v407
        %496 = vmatpush1.bf16.msra.mxu0 %v406
        %497 = vmatprep.subr.bf16.mxu0 %v403
        %498 = vmatpush1.bf16.msra.mxu0 %v402
        %499 = vmatprep.subr.bf16.mxu0 %v399
        %500 = vmatpush1.bf16.msra.mxu0 %v398
        %501 = vmatprep.subr.bf16.mxu0 %v395
        %502 = vmatpush1.bf16.msra.mxu0 %v394
        %503 = vmatprep.subr.bf16.mxu0 %v391
        %504 = vmatpush1.bf16.msra.mxu0 %v390
        %505 = vmatprep.subr.bf16.mxu0 %v387
        %506 = vmatpush1.bf16.msra.mxu0 %v386
        %507 = vmatprep.subr.bf16.mxu0 0
        %508 = vmatpush2.bf16.msra.mxu0 0
        %509 = vmatprep.subr.bf16.mxu0 0
        %510 = vmatpush2.bf16.msra.mxu0 0
        %511 = vmatprep.subr.bf16.mxu0 0
        %512 = vmatpush2.bf16.msra.mxu0 0
        %513 = vmatprep.subr.bf16.mxu0 0
        %514 = vmatpush2.bf16.msra.mxu0 0
        %515 = vmatprep.subr.bf16.mxu0 0
        %516 = vmatpush2.bf16.msra.mxu0 0
        %517 = vmatprep.subr.bf16.mxu0 0
        %518 = vmatpush2.bf16.msra.mxu0 0
        %519 = vmatprep.subr.bf16.mxu0 0
        %520 = vmatpush2.bf16.msra.mxu0 0
        %521 = vmatprep.subr.bf16.mxu0 0
        %522 = vmatpush2.bf16.msra.mxu0 0
        %523 = vmatprep.mubr.bf16.mxu0 0
        %524 = vmatmul.mubr.bf16.gmra.mxu0 %v286
        %v525 = vpop.f32.mrf.mxu0
        %v526 = vadd.f32 0.0, %v525
        %v527 = vpop.f32.mrf.mxu0
        %v528 = vadd.f32 0.0, %v527
        %v529 = vpop.f32.mrf.mxu0
        %v530 = vadd.f32 0.0, %v529
        %v531 = vpop.f32.mrf.mxu0
        %v532 = vadd.f32 0.0, %v531
        %533 = vdwg.mxu0
        %534 = vst [vmem:[#allocation2] sm:$0xff] %v483
        %535 = vst [vmem:[#allocation2 + $0x8] sm:$0xff] %v487
        %536 = vst [vmem:[#allocation2 + $0x10] sm:$0x7] 0.0
        %v537 = vld [vmem:[#allocation2 + $0x1] sm:$0xff]
        %v538 = vld [vmem:[#allocation2 + $0x9] sm:$0xff]
        %v539 = vadd.f32 %v537, %v485
        %v540 = vadd.f32 %v538, %v489
        %541 = vst [vmem:[#allocation2 + $0x1] sm:$0xff] %v539
        %542 = vst [vmem:[#allocation2 + $0x9] sm:$0xff] %v540
        %v543 = vld [vmem:[#allocation2 + $0x2] sm:$0xff]
        %v544 = vld [vmem:[#allocation2 + $0xa] sm:$0xff]
        %v545 = vadd.f32 %v543, %v526
        %v546 = vadd.f32 %v544, %v530
        %547 = vst [vmem:[#allocation2 + $0x2] sm:$0xff] %v545
        %548 = vst [vmem:[#allocation2 + $0xa] sm:$0xff] %v546
        %v549 = vld [vmem:[#allocation2 + $0x3] sm:$0xff]
        %v550 = vld [vmem:[#allocation2 + $0xb] sm:$0xff]
        %v551 = vadd.f32 %v549, %v528
        %v552 = vadd.f32 %v550, %v532
        %553 = vst [vmem:[#allocation2 + $0x3] sm:$0xff] %v551
        %554 = vst [vmem:[#allocation2 + $0xb] sm:$0xff] %v552
        %v555 = vld [vmem:[#allocation2] sm:$0xff]
        %v556 = vld [vmem:[#allocation2 + $0x8] sm:$0xff]
        %v557 = vld [vmem:[#allocation9] sm:$0xff]
        %v558 = vld [vmem:[#allocation9 + $0x8] sm:$0xff]
        %v559 = vmul.f32 %v555, %v557
        %v560 = vmul.f32 %v556, %v558
        %561 = vst [vmem:[%s243] sm:$0xff] %v559
        %562 = vst [vmem:[%s243 + $0x8] sm:$0xff] %v560
        %s563 = sand.u32 %s118, 1
        %s564 = scalar_lea.sflag [#allocation6], %s563
        %s565 = sand.u32 %s118, 1
        %s566 = smul.addr %s565, 16
        %s567 = scalar_lea.vmem [#allocation10], %s566
        // Predicated region
        $region45: #{tpu_custom_call.1} parent=31 // pred_check
          %p568 = pneg %p128
        $region46: #{tpu_custom_call.1} parent=31 // pred_check_branch
          %570 = sbr.rel (%p568) target = $region48
        $region47: #{tpu_custom_call.1} parent=31 // pred_region
          %s571 = smul.u32 2, %s26
          %s573 = ssub.s32 256, 256
          %574 = vsyncadd %s564, %s573
          %s575 = smul.addr %s25, 2
          %s576 = sadd.s32 %s571, %s575
          %s577 = smul.addr %s576, 128
          %s578 = scalar_lea.hbm %s3, %s577
          %s579 = sshll.u32 %s567, 4
          %s580 = int_to_ptr.vmem [resolvable:$true] %s579
          %585 = dma.vmem_to_hbm [thread:$0]  %s580, 256, %s578, %s564, 128, 128, 8
        $region48: #{tpu_custom_call.1} parent=31 // pred_fallthru
          _
      $region32: #{tpu_custom_call.1} parent=5 // pred_fallthru
        _
      %p586 = scmp.le.s32.totalorder 2, %s16
      // Predicated region
      $region49: #{tpu_custom_call.1} parent=5 // pred_check
        %p587 = pneg %p586
      $region50: #{tpu_custom_call.1} parent=5 // pred_check_branch
        %589 = sbr.rel (%p587) target = $region52
      $region51: #{tpu_custom_call.1} parent=5 // pred_region
        %s590 = ssub.s32 %s16, 2
        // Predicated region
        $region53: #{tpu_custom_call.1} parent=51 // pred_check
          %p591 = pneg %p134
        $region54: #{tpu_custom_call.1} parent=51 // pred_check_branch
          %593 = sbr.rel (%p591) target = $region56
        $region55: #{tpu_custom_call.1} parent=51 // pred_region
          %s594 = sand.u32 %s119, 1
          %s595 = scalar_lea.sflag [#allocation6], %s594
          %s596 = sand.u32 %s119, 1
          %s597 = smul.addr %s596, 16
          %s598 = scalar_lea.vmem [#allocation10], %s597
          %599 = dma.done %s595, 256
        $region56: #{tpu_custom_call.1} parent=51 // pred_fallthru
          _
      $region52: #{tpu_custom_call.1} parent=5 // pred_fallthru
        _
    $region6: #{tpu_custom_call.1} parent=1 // loop_footer
      %s20 = sadd.s32 1, %s16
    $region7: #{tpu_custom_call.1} parent=1 // loop_footer_branch
      %15 = sbr.rel target = $region3
    $region8: #{tpu_custom_call.1} parent=1 // loop_exit
      _
    %600 = vsyncpa [#allocation5], 1
    %s601 = scalar_lea.sflag [#allocation5], 1
    %602 = vsyncpa %s601, 1
    %603 = vsyncpa [#allocation8], 1
    %604 = vsyncpa [#allocation6], 1
    %s605 = scalar_lea.sflag [#allocation6], 1
    %606 = vsyncpa %s605, 1

// kernel: tpu_custom_call.1
$region0: #{tpu_custom_call.1}
  #allocation0 [shape = 'u32[]', space=smem, size = 0x4, offset = 0x4, fixed_abs, tag = 'smem constant byte address 0x4 - core index']
  #allocation1 [shape = 'u32[144,128]{1,0:T(1,128)}', space=vmem, size = 0x12000, scoped, tag = 'internal scratch']
  #allocation2 [shape = 'f32[19,128]{1,0:T(8,128)}', space=vmem, size = 0x3000, scoped, tag = 'scratch operand']
  #allocation3 [shape = 'f32[3,128]{1,0:T(4,128)}', space=vmem, size = 0x800, scoped, tag = 'scratch operand']
  %s0 = inlined_call_operand.hbm [shape: bf16[2,16,128], index: 0, kind: input, shape index: {}]
  %s1 = inlined_call_operand.hbm [shape: bf16[128,512], index: 1, kind: input, shape index: {}]
  %s2 = inlined_call_operand.hbm [shape: f32[16,128], index: 2, kind: input, shape index: {}]
  %s3 = inlined_call_operand.hbm [shape: f32[2,16,128], index: 3, kind: output, shape index: {}]
  %s4 = sld [smem:[#allocation0]]
  $region57: #{tpu_custom_call.1} parent=0
    _
  %s6 = ssub.s32 1, %s4
  %s7 = scalar_select 0, %s6, %s4
  $region1: #{tpu_custom_call.1} parent=0
    #allocation4 [shape = 'u8[8192]{0}', space=vmem, size = 0x2000, scoped, tag = 'input window, operand 0']
    #allocation5 [shape = 's32[2]{0}', space=sflag, size = 0x8, scoped, tag = 'scoped memory for tpu_custom_call.1']
    #allocation6 [shape = 's32[2]{0}', space=sflag, size = 0x8, scoped, tag = 'scoped memory for tpu_custom_call.1']
    #allocation7 [shape = 'u8[131072]{0}', space=vmem, size = 0x20000, scoped, tag = 'input window, operand 1, single buffered']
    #allocation8 [shape = 's32[1]{0}', space=sflag, size = 0x4, scoped, tag = 'scoped memory for tpu_custom_call.1']
    #allocation9 [shape = 'u8[8192]{0}', space=vmem, size = 0x2000, scoped, tag = 'input window, operand 2, single buffered']
    #allocation10 [shape = 'u8[16384]{0}', space=vmem, size = 0x4000, scoped, tag = 'output window, operand 0']
    %8 = vsyncpa [#allocation5], 0
    %s9 = scalar_lea.sflag [#allocation5], 1
    %10 = vsyncpa %s9, 0
    %11 = vsyncpa [#allocation8], 0
    %12 = vsyncpa [#allocation6], 0
    %s13 = scalar_lea.sflag [#allocation6], 1
    %14 = vsyncpa %s13, 0
    loop: start=0, step=1, limit=4
    $region2: #{tpu_custom_call.1} parent=1 // loop_pre_header
      _
    $region3: #{tpu_custom_call.1} parent=1 // loop_header
      %s16 = sphi 0, %s20
      %p17 = scmp.ge.s32.totalorder %s16, 4
      %s23 = sphi 0, %s35
      %s24 = sphi 0, %s31
      %s25 = sphi 0, %s23
      %s26 = sphi 0, %s24
      %s27 = sphi 0, %s25
      %s28 = sphi 0, %s26
      %s40 = sphi 0, %s42
      %s43 = sphi 0, %s40
      %s44 = sphi 0, %s43
      %s60 = sphi 0, %s44
      %s64 = sphi 0, %s64
      %s66 = sphi 0, %s64
      %s67 = sphi 0, %s66
      %s81 = sphi 0, %s67
      %s87 = sphi 0, %s89
      %s90 = sphi 0, %s87
      %s91 = sphi 0, %s90
      %s107 = sphi 0, %s91
      %s115 = sphi 0, %s117
      %s118 = sphi 0, %s115
      %s119 = sphi 0, %s118
      %s135 = sphi 0, %s119
    $region4: #{tpu_custom_call.1} parent=1 // loop_header_branch
      %19 = sbr.rel (%p17) target = $region8
    $region5: #{tpu_custom_call.1} parent=1 // loop_body
      %s21 = ssub.s32 %s16, 1
      %s22 = ssub.s32 %s16, 2
      %s29 = sadd.s32 1, %s24
      %p30 = scmp.ge.s32.totalorder %s29, 1
      %s31 = scalar_select %p30, 0, %s29
      %s32 = sadd.s32 1, %s23
      %s33 = scalar_select %p30, %s32, %s23
      %p34 = scmp.ge.s32.totalorder %s33, 2
      %s35 = scalar_select %p34, 0, %s33
      %s36 = ssub.s32 %s23, %s35
      %s37 = ssub.s32 %s24, %s31
      %s38 = sor.u32 %s36, %s37
      %p39 = scmp.eq.s32.totalorder %s38, 0
      %s41 = sadd.s32 %s40, 1
      %s42 = scalar_select %p39, %s40, %s41
      %p45 = pneg %p39
      %p46 = scmp.eq.s32.totalorder %s16, 1
      %p47 = por %p45, %p46
      %p48 = scmp.ne.s32.totalorder %s40, %s43
      %p49 = scmp.eq.s32.totalorder %s16, 0
      %p50 = por %p48, %p49
      %p51 = scmp.ne.s32.totalorder %s40, %s43
      %p52 = scmp.eq.s32.totalorder %s21, 1
      %p53 = por %p51, %p52
      %p54 = scmp.ne.s32.totalorder %s43, %s44
      %p55 = scmp.eq.s32.totalorder %s21, 0
      %p56 = por %p54, %p55
      %p57 = scmp.ne.s32.totalorder %s43, %s44
      %p58 = scmp.eq.s32.totalorder %s22, 1
      %p59 = por %p57, %p58
      %p61 = scmp.ne.s32.totalorder %s44, %s60
      %p62 = scmp.eq.s32.totalorder %s22, 0
      %p63 = por %p61, %p62
      %s65 = sadd.s32 %s64, 1
      %p68 = scmp.eq.s32.totalorder %s16, 1
      %p69 = scmp.ne.s32.totalorder %s64, %s66
      %p70 = scmp.eq.s32.totalorder %s16, 0
      %p71 = por %p69, %p70
      %p72 = scmp.ne.s32.totalorder %s64, %s66
      %p73 = scmp.eq.s32.totalorder %s21, 1
      %p74 = por %p72, %p73
      %p75 = scmp.ne.s32.totalorder %s66, %s67
      %p76 = scmp.eq.s32.totalorder %s21, 0
      %p77 = por %p75, %p76
      %p78 = scmp.ne.s32.totalorder %s66, %s67
      %p79 = scmp.eq.s32.totalorder %s22, 1
      %p80 = por %p78, %p79
      %p82 = scmp.ne.s32.totalorder %s67, %s81
      %p83 = scmp.eq.s32.totalorder %s22, 0
      %p84 = por %p82, %p83
      %s85 = ssub.s32 %s24, %s31
      %p86 = scmp.eq.s32.totalorder %s85, 0
      %s88 = sadd.s32 %s87, 1
      %s89 = scalar_select %p86, %s87, %s88
      %p92 = pneg %p86
      %p93 = scmp.eq.s32.totalorder %s16, 1
      %p94 = por %p92, %p93
      %p95 = scmp.ne.s32.totalorder %s87, %s90
      %p96 = scmp.eq.s32.totalorder %s16, 0
      %p97 = por %p95, %p96
      %p98 = scmp.ne.s32.totalorder %s87, %s90
      %p99 = scmp.eq.s32.totalorder %s21, 1
      %p100 = por %p98, %p99
      %p101 = scmp.ne.s32.totalorder %s90, %s91
      %p102 = scmp.eq.s32.totalorder %s21, 0
      %p103 = por %p101, %p102
      %p104 = scmp.ne.s32.totalorder %s90, %s91
      %p105 = scmp.eq.s32.totalorder %s22, 1
      %p106 = por %p104, %p105
      %p108 = scmp.ne.s32.totalorder %s91, %s107
      %p109 = scmp.eq.s32.totalorder %s22, 0
      %p110 = por %p108, %p109
      %s111 = ssub.s32 %s23, %s35
      %s112 = ssub.s32 %s24, %s31
      %s113 = sor.u32 %s111, %s112
      %p114 = scmp.eq.s32.totalorder %s113, 0
      %s116 = sadd.s32 %s115, 1
      %s117 = scalar_select %p114, %s115, %s116
      %p120 = pneg %p114
      %p121 = scmp.eq.s32.totalorder %s16, 1
      %p122 = por %p120, %p121
      %p123 = scmp.ne.s32.totalorder %s115, %s118
      %p124 = scmp.eq.s32.totalorder %s16, 0
      %p125 = por %p123, %p124
      %p126 = scmp.ne.s32.totalorder %s115, %s118
      %p127 = scmp.eq.s32.totalorder %s21, 1
      %p128 = por %p126, %p127
      %p129 = scmp.ne.s32.totalorder %s118, %s119
      %p130 = scmp.eq.s32.totalorder %s21, 0
      %p131 = por %p129, %p130
      %p132 = scmp.ne.s32.totalorder %s118, %s119
      %p133 = scmp.eq.s32.totalorder %s22, 1
      %p134 = por %p132, %p133
      %p136 = scmp.ne.s32.totalorder %s119, %s135
      %p137 = scmp.eq.s32.totalorder %s22, 0
      %p138 = por %p136, %p137
      %p139 = scmp.le.s32.totalorder 1, %s16
      %p140 = scmp.lt.s32.totalorder %s16, 3
      %p141 = pnand %p139, %p140
      %p142 = pneg %p141
      // Predicated region
      $region9: #{tpu_custom_call.1} parent=5 // pred_check
        _
      $region10: #{tpu_custom_call.1} parent=5 // pred_check_branch
        %144 = sbr.rel (%p141) target = $region12
      $region11: #{tpu_custom_call.1} parent=5 // pred_region
        %s145 = ssub.s32 %s16, 1
        // Predicated region
        $region13: #{tpu_custom_call.1} parent=11 // pred_check
          %p146 = pneg %p77
        $region14: #{tpu_custom_call.1} parent=11 // pred_check_branch
          %148 = sbr.rel (%p146) target = $region16
        $region15: #{tpu_custom_call.1} parent=11 // pred_region
          %s150 = ssub.s32 4096, 4096
          %151 = vsyncadd [#allocation8], %s150
          %s152 = sshll.u32 [#allocation7], 4
          %s153 = int_to_ptr.vmem [resolvable:$true] %s152
          %158 = dma.hbm_to_vmem [thread:$0]  %s1, 4096, %s153, [#allocation8], 256, 256, 16
        $region16: #{tpu_custom_call.1} parent=11 // pred_fallthru
          _
        // Predicated region
        $region17: #{tpu_custom_call.1} parent=11 // pred_check
          %p159 = pneg %p103
        $region18: #{tpu_custom_call.1} parent=11 // pred_check_branch
          %161 = sbr.rel (%p159) target = $region20
        $region19: #{tpu_custom_call.1} parent=11 // pred_region
          %s162 = smul.u32 2, %s26
          %s164 = ssub.s32 256, 256
          %165 = vsyncadd [#allocation8], %s164
          %s166 = smul.addr %s162, 128
          %s167 = scalar_lea.hbm %s2, %s166
          %s168 = sshll.u32 [#allocation9], 4
          %s169 = int_to_ptr.vmem [resolvable:$true] %s168
          %174 = dma.hbm_to_vmem [thread:$0]  %s167, 256, %s169, [#allocation8], 128, 128, 8
        $region20: #{tpu_custom_call.1} parent=11 // pred_fallthru
          _
      $region12: #{tpu_custom_call.1} parent=5 // pred_fallthru
        _
      %p175 = scmp.lt.s32.totalorder %s16, 2
      // Predicated region
      $region21: #{tpu_custom_call.1} parent=5 // pred_check
        %p176 = pneg %p175
      $region22: #{tpu_custom_call.1} parent=5 // pred_check_branch
        %178 = sbr.rel (%p176) target = $region24
      $region23: #{tpu_custom_call.1} parent=5 // pred_region
        // Predicated region
        $region25: #{tpu_custom_call.1} parent=23 // pred_check
          %p179 = pneg %p50
        $region26: #{tpu_custom_call.1} parent=23 // pred_check_branch
          %181 = sbr.rel (%p179) target = $region28
        $region27: #{tpu_custom_call.1} parent=23 // pred_region
          %s182 = sand.u32 %s40, 1
          %s183 = scalar_lea.sflag [#allocation5], %s182
          %s184 = sand.u32 %s40, 1
          %s185 = smul.addr %s184, 8
          %s186 = scalar_lea.vmem [#allocation4], %s185
          %s187 = smul.u32 2, %s24
          %s189 = ssub.s32 128, 128
          %190 = vsyncadd %s183, %s189
          %s191 = smul.addr %s23, 2
          %s192 = sadd.s32 %s187, %s191
          %s193 = smul.addr %s192, 64
          %s194 = scalar_lea.hbm %s0, %s193
          %s195 = sshll.u32 %s186, 4
          %s196 = int_to_ptr.vmem [resolvable:$true] %s195
          %201 = dma.hbm_to_vmem [thread:$0]  %s194, 128, %s196, %s183, 64, 64, 4
        $region28: #{tpu_custom_call.1} parent=23 // pred_fallthru
          _
      $region24: #{tpu_custom_call.1} parent=5 // pred_fallthru
        _
      %p202 = scmp.le.s32.totalorder 1, %s16
      %p203 = scmp.lt.s32.totalorder %s16, 3
      %p204 = pnand %p202, %p203
      %p205 = pneg %p204
      // Predicated region
      $region29: #{tpu_custom_call.1} parent=5 // pred_check
        _
      $region30: #{tpu_custom_call.1} parent=5 // pred_check_branch
        %207 = sbr.rel (%p204) target = $region32
      $region31: #{tpu_custom_call.1} parent=5 // pred_region
        %s208 = ssub.s32 %s16, 1
        %s209 = sand.u32 %s43, 1
        %s210 = scalar_lea.sflag [#allocation5], %s209
        %s211 = sand.u32 %s43, 1
        %s212 = smul.addr %s211, 8
        %s213 = scalar_lea.vmem [#allocation4], %s212
        // Predicated region
        $region33: #{tpu_custom_call.1} parent=31 // pred_check
          %p214 = pneg %p56
        $region34: #{tpu_custom_call.1} parent=31 // pred_check_branch
          %216 = sbr.rel (%p214) target = $region36
        $region35: #{tpu_custom_call.1} parent=31 // pred_region
          %217 = dma.done %s210, 128
        $region36: #{tpu_custom_call.1} parent=31 // pred_fallthru
          _
        // Predicated region
        $region37: #{tpu_custom_call.1} parent=31 // pred_check
          %p218 = pneg %p77
        $region38: #{tpu_custom_call.1} parent=31 // pred_check_branch
          %220 = sbr.rel (%p218) target = $region40
        $region39: #{tpu_custom_call.1} parent=31 // pred_region
          %221 = dma.done [#allocation8], 4096
        $region40: #{tpu_custom_call.1} parent=31 // pred_fallthru
          _
        // Predicated region
        $region41: #{tpu_custom_call.1} parent=31 // pred_check
          %p222 = pneg %p103
        $region42: #{tpu_custom_call.1} parent=31 // pred_check_branch
          %224 = sbr.rel (%p222) target = $region44
        $region43: #{tpu_custom_call.1} parent=31 // pred_region
          %225 = dma.done [#allocation8], 256
        $region44: #{tpu_custom_call.1} parent=31 // pred_fallthru
          _
        %s226 = sand.u32 %s43, 1
        %s227 = scalar_lea.sflag [#allocation5], %s226
        %s228 = sand.u32 %s43, 1
        %s229 = smul.addr %s228, 8
        %s230 = scalar_lea.vmem [#allocation4], %s229
        %p231 = pneg %p56
        %p232 = pneg %p53
        %p233 = pneg %p77
        %p234 = pneg %p74
        %p235 = pneg %p103
        %p236 = pneg %p100
        %p237 = pneg %p131
        %p238 = pneg %p128
        %s239 = sand.u32 %s118, 1
        %s240 = scalar_lea.sflag [#allocation6], %s239
        %s241 = sand.u32 %s118, 1
        %s242 = smul.addr %s241, 16
        %s243 = scalar_lea.vmem [#allocation10], %s242
        %s244 = smul.u32 2, %s26
        %s245 = smul.u32 2, %s26
        %s246 = smul.u32 2, %s26
        %v248 = vld [vmem:[%s213] sm:$0xf]
        %v249 = vld [vmem:[%s213 + $0x4] sm:$0xf]
        %v250 = vld [vmem:[#allocation7] sm:$0xff]
        %v251 = vld [vmem:[#allocation7 + $0x8] sm:$0xff]
        %v252 = vld [vmem:[#allocation7 + $0x10] sm:$0xff]
        %v253 = vld [vmem:[#allocation7 + $0x18] sm:$0xff]
        %v254 = vld [vmem:[#allocation7 + $0x20] sm:$0xff]
        %v255 = vld [vmem:[#allocation7 + $0x28] sm:$0xff]
        %v256 = vld [vmem:[#allocation7 + $0x30] sm:$0xff]
        %v257 = vld [vmem:[#allocation7 + $0x38] sm:$0xff]
        %v258 = vld [vmem:[#allocation7 + $0x40] sm:$0xff]
        %v259 = vld [vmem:[#allocation7 + $0x48] sm:$0xff]
        %v260 = vld [vmem:[#allocation7 + $0x50] sm:$0xff]
        %v261 = vld [vmem:[#allocation7 + $0x58] sm:$0xff]
        %v262 = vld [vmem:[#allocation7 + $0x60] sm:$0xff]
        %v263 = vld [vmem:[#allocation7 + $0x68] sm:$0xff]
        %v264 = vld [vmem:[#allocation7 + $0x70] sm:$0xff]
        %v265 = vld [vmem:[#allocation7 + $0x78] sm:$0xff]
        %v266 = vld [vmem:[#allocation7 + $0x80] sm:$0xff]
        %v267 = vld [vmem:[#allocation7 + $0x88] sm:$0xff]
        %v268 = vld [vmem:[#allocation7 + $0x90] sm:$0xff]
        %v269 = vld [vmem:[#allocation7 + $0x98] sm:$0xff]
        %v270 = vld [vmem:[#allocation7 + $0xa0] sm:$0xff]
        %v271 = vld [vmem:[#allocation7 + $0xa8] sm:$0xff]
        %v272 = vld [vmem:[#allocation7 + $0xb0] sm:$0xff]
        %v273 = vld [vmem:[#allocation7 + $0xb8] sm:$0xff]
        %v274 = vld [vmem:[#allocation7 + $0xc0] sm:$0xff]
        %v275 = vld [vmem:[#allocation7 + $0xc8] sm:$0xff]
        %v276 = vld [vmem:[#allocation7 + $0xd0] sm:$0xff]
        %v277 = vld [vmem:[#allocation7 + $0xd8] sm:$0xff]
        %v278 = vld [vmem:[#allocation7 + $0xe0] sm:$0xff]
        %v279 = vld [vmem:[#allocation7 + $0xe8] sm:$0xff]
        %v280 = vld [vmem:[#allocation7 + $0xf0] sm:$0xff]
        %v281 = vld [vmem:[#allocation7 + $0xf8] sm:$0xff]
        %v284 = vunpack.c.l.b16 %v248
        %v285 = vunpack.c.l.b16 %v249
        %v286 = vpack.c.b16 %v285, %v284
        %v320 = vunpack.c.l.b16 %v250
        %v321 = vunpack.c.h.b16 %v250
        %v322 = vunpack.c.l.b16 %v251
        %v323 = vunpack.c.h.b16 %v251
        %v324 = vunpack.c.l.b16 %v252
        %v325 = vunpack.c.h.b16 %v252
        %v326 = vunpack.c.l.b16 %v253
        %v327 = vunpack.c.h.b16 %v253
        %v328 = vunpack.c.l.b16 %v254
        %v329 = vunpack.c.h.b16 %v254
        %v330 = vunpack.c.l.b16 %v255
        %v331 = vunpack.c.h.b16 %v255
        %v332 = vunpack.c.l.b16 %v256
        %v333 = vunpack.c.h.b16 %v256
        %v334 = vunpack.c.l.b16 %v257
        %v335 = vunpack.c.h.b16 %v257
        %v336 = vunpack.c.l.b16 %v258
        %v337 = vunpack.c.h.b16 %v258
        %v338 = vunpack.c.l.b16 %v259
        %v339 = vunpack.c.h.b16 %v259
        %v340 = vunpack.c.l.b16 %v260
        %v341 = vunpack.c.h.b16 %v260
        %v342 = vunpack.c.l.b16 %v261
        %v343 = vunpack.c.h.b16 %v261
        %v344 = vunpack.c.l.b16 %v262
        %v345 = vunpack.c.h.b16 %v262
        %v346 = vunpack.c.l.b16 %v263
        %v347 = vunpack.c.h.b16 %v263
        %v348 = vunpack.c.l.b16 %v264
        %v349 = vunpack.c.h.b16 %v264
        %v350 = vunpack.c.l.b16 %v265
        %v351 = vunpack.c.h.b16 %v265
        %v352 = vunpack.c.l.b16 %v266
        %v353 = vunpack.c.h.b16 %v266
        %v354 = vunpack.c.l.b16 %v267
        %v355 = vunpack.c.h.b16 %v267
        %v356 = vunpack.c.l.b16 %v268
        %v357 = vunpack.c.h.b16 %v268
        %v358 = vunpack.c.l.b16 %v269
        %v359 = vunpack.c.h.b16 %v269
        %v360 = vunpack.c.l.b16 %v270
        %v361 = vunpack.c.h.b16 %v270
        %v362 = vunpack.c.l.b16 %v271
        %v363 = vunpack.c.h.b16 %v271
        %v364 = vunpack.c.l.b16 %v272
        %v365 = vunpack.c.h.b16 %v272
        %v366 = vunpack.c.l.b16 %v273
        %v367 = vunpack.c.h.b16 %v273
        %v368 = vunpack.c.l.b16 %v274
        %v369 = vunpack.c.h.b16 %v274
        %v370 = vunpack.c.l.b16 %v275
        %v371 = vunpack.c.h.b16 %v275
        %v372 = vunpack.c.l.b16 %v276
        %v373 = vunpack.c.h.b16 %v276
        %v374 = vunpack.c.l.b16 %v277
        %v375 = vunpack.c.h.b16 %v277
        %v376 = vunpack.c.l.b16 %v278
        %v377 = vunpack.c.h.b16 %v278
        %v378 = vunpack.c.l.b16 %v279
        %v379 = vunpack.c.h.b16 %v279
        %v380 = vunpack.c.l.b16 %v280
        %v381 = vunpack.c.h.b16 %v280
        %v382 = vunpack.c.l.b16 %v281
        %v383 = vunpack.c.h.b16 %v281
        %v384 = vpack.c.b16 %v324, %v320
        %v385 = vpack.c.b16 %v325, %v321
        %v386 = vpack.c.b16 %v326, %v322
        %v387 = vpack.c.b16 %v327, %v323
        %v388 = vpack.c.b16 %v332, %v328
        %v389 = vpack.c.b16 %v333, %v329
        %v390 = vpack.c.b16 %v334, %v330
        %v391 = vpack.c.b16 %v335, %v331
        %v392 = vpack.c.b16 %v340, %v336
        %v393 = vpack.c.b16 %v341, %v337
        %v394 = vpack.c.b16 %v342, %v338
        %v395 = vpack.c.b16 %v343, %v339
        %v396 = vpack.c.b16 %v348, %v344
        %v397 = vpack.c.b16 %v349, %v345
        %v398 = vpack.c.b16 %v350, %v346
        %v399 = vpack.c.b16 %v351, %v347
        %v400 = vpack.c.b16 %v356, %v352
        %v401 = vpack.c.b16 %v357, %v353
        %v402 = vpack.c.b16 %v358, %v354
        %v403 = vpack.c.b16 %v359, %v355
        %v404 = vpack.c.b16 %v364, %v360
        %v405 = vpack.c.b16 %v365, %v361
        %v406 = vpack.c.b16 %v366, %v362
        %v407 = vpack.c.b16 %v367, %v363
        %v408 = vpack.c.b16 %v372, %v368
        %v409 = vpack.c.b16 %v373, %v369
        %v410 = vpack.c.b16 %v374, %v370
        %v411 = vpack.c.b16 %v375, %v371
        %v412 = vpack.c.b16 %v380, %v376
        %v413 = vpack.c.b16 %v381, %v377
        %v414 = vpack.c.b16 %v382, %v378
        %v415 = vpack.c.b16 %v383, %v379
        %448 = vmatprep.subr.bf16.mxu0 %v413
        %449 = vmatpush1.bf16.msra.mxu0 %v412
        %450 = vmatprep.subr.bf16.mxu0 %v409
        %451 = vmatpush1.bf16.msra.mxu0 %v408
        %452 = vmatprep.subr.bf16.mxu0 %v405
        %453 = vmatpush1.bf16.msra.mxu0 %v404
        %454 = vmatprep.subr.bf16.mxu0 %v401
        %455 = vmatpush1.bf16.msra.mxu0 %v400
        %456 = vmatprep.subr.bf16.mxu0 %v397
        %457 = vmatpush1.bf16.msra.mxu0 %v396
        %458 = vmatprep.subr.bf16.mxu0 %v393
        %459 = vmatpush1.bf16.msra.mxu0 %v392
        %460 = vmatprep.subr.bf16.mxu0 %v389
        %461 = vmatpush1.bf16.msra.mxu0 %v388
        %462 = vmatprep.subr.bf16.mxu0 %v385
        %463 = vmatpush1.bf16.msra.mxu0 %v384
        %464 = vmatprep.subr.bf16.mxu0 0
        %465 = vmatpush2.bf16.msra.mxu0 0
        %466 = vmatprep.subr.bf16.mxu0 0
        %467 = vmatpush2.bf16.msra.mxu0 0
        %468 = vmatprep.subr.bf16.mxu0 0
        %469 = vmatpush2.bf16.msra.mxu0 0
        %470 = vmatprep.subr.bf16.mxu0 0
        %471 = vmatpush2.bf16.msra.mxu0 0
        %472 = vmatprep.subr.bf16.mxu0 0
        %473 = vmatpush2.bf16.msra.mxu0 0
        %474 = vmatprep.subr.bf16.mxu0 0
        %475 = vmatpush2.bf16.msra.mxu0 0
        %476 = vmatprep.subr.bf16.mxu0 0
        %477 = vmatpush2.bf16.msra.mxu0 0
        %478 = vmatprep.subr.bf16.mxu0 0
        %479 = vmatpush2.bf16.msra.mxu0 0
        %480 = vmatprep.mubr.bf16.mxu0 0
        %481 = vmatmul.mubr.bf16.gmra.mxu0 %v286
        %v482 = vpop.f32.mrf.mxu0
        %v483 = vadd.f32 0.0, %v482
        %v484 = vpop.f32.mrf.mxu0
        %v485 = vadd.f32 0.0, %v484
        %v486 = vpop.f32.mrf.mxu0
        %v487 = vadd.f32 0.0, %v486
        %v488 = vpop.f32.mrf.mxu0
        %v489 = vadd.f32 0.0, %v488
        %490 = vdwg.mxu0
        %491 = vmatprep.subr.bf16.mxu0 %v415
        %492 = vmatpush1.bf16.msra.mxu0 %v414
        %493 = vmatprep.subr.bf16.mxu0 %v411
        %494 = vmatpush1.bf16.msra.mxu0 %v410
        %495 = vmatprep.subr.bf16.mxu0 %v407
        %496 = vmatpush1.bf16.msra.mxu0 %v406
        %497 = vmatprep.subr.bf16.mxu0 %v403
        %498 = vmatpush1.bf16.msra.mxu0 %v402
        %499 = vmatprep.subr.bf16.mxu0 %v399
        %500 = vmatpush1.bf16.msra.mxu0 %v398
        %501 = vmatprep.subr.bf16.mxu0 %v395
        %502 = vmatpush1.bf16.msra.mxu0 %v394
        %503 = vmatprep.subr.bf16.mxu0 %v391
        %504 = vmatpush1.bf16.msra.mxu0 %v390
        %505 = vmatprep.subr.bf16.mxu0 %v387
        %506 = vmatpush1.bf16.msra.mxu0 %v386
        %507 = vmatprep.subr.bf16.mxu0 0
        %508 = vmatpush2.bf16.msra.mxu0 0
        %509 = vmatprep.subr.bf16.mxu0 0
        %510 = vmatpush2.bf16.msra.mxu0 0
        %511 = vmatprep.subr.bf16.mxu0 0
        %512 = vmatpush2.bf16.msra.mxu0 0
        %513 = vmatprep.subr.bf16.mxu0 0
        %514 = vmatpush2.bf16.msra.mxu0 0
        %515 = vmatprep.subr.bf16.mxu0 0
        %516 = vmatpush2.bf16.msra.mxu0 0
        %517 = vmatprep.subr.bf16.mxu0 0
        %518 = vmatpush2.bf16.msra.mxu0 0
        %519 = vmatprep.subr.bf16.mxu0 0
        %520 = vmatpush2.bf16.msra.mxu0 0
        %521 = vmatprep.subr.bf16.mxu0 0
        %522 = vmatpush2.bf16.msra.mxu0 0
        %523 = vmatprep.mubr.bf16.mxu0 0
        %524 = vmatmul.mubr.bf16.gmra.mxu0 %v286
        %v525 = vpop.f32.mrf.mxu0
        %v526 = vadd.f32 0.0, %v525
        %v527 = vpop.f32.mrf.mxu0
        %v528 = vadd.f32 0.0, %v527
        %v529 = vpop.f32.mrf.mxu0
        %v530 = vadd.f32 0.0, %v529
        %v531 = vpop.f32.mrf.mxu0
        %v532 = vadd.f32 0.0, %v531
        %533 = vdwg.mxu0
        %534 = vst [vmem:[#allocation2] sm:$0xff] %v483
        %535 = vst [vmem:[#allocation2 + $0x8] sm:$0xff] %v487
        %536 = vst [vmem:[#allocation2 + $0x10] sm:$0x7] 0.0
        %v537 = vld [vmem:[#allocation2 + $0x1] sm:$0xff]
        %v538 = vld [vmem:[#allocation2 + $0x9] sm:$0xff]
        %v539 = vadd.f32 %v537, %v485
        %v540 = vadd.f32 %v538, %v489
        %541 = vst [vmem:[#allocation2 + $0x1] sm:$0xff] %v539
        %542 = vst [vmem:[#allocation2 + $0x9] sm:$0xff] %v540
        %v543 = vld [vmem:[#allocation2 + $0x2] sm:$0xff]
        %v544 = vld [vmem:[#allocation2 + $0xa] sm:$0xff]
        %v545 = vadd.f32 %v543, %v526
        %v546 = vadd.f32 %v544, %v530
        %547 = vst [vmem:[#allocation2 + $0x2] sm:$0xff] %v545
        %548 = vst [vmem:[#allocation2 + $0xa] sm:$0xff] %v546
        %v549 = vld [vmem:[#allocation2 + $0x3] sm:$0xff]
        %v550 = vld [vmem:[#allocation2 + $0xb] sm:$0xff]
        %v551 = vadd.f32 %v549, %v528
        %v552 = vadd.f32 %v550, %v532
        %553 = vst [vmem:[#allocation2 + $0x3] sm:$0xff] %v551
        %554 = vst [vmem:[#allocation2 + $0xb] sm:$0xff] %v552
        %v555 = vld [vmem:[#allocation2] sm:$0xff]
        %v556 = vld [vmem:[#allocation2 + $0x8] sm:$0xff]
        %v557 = vld [vmem:[#allocation9] sm:$0xff]
        %v558 = vld [vmem:[#allocation9 + $0x8] sm:$0xff]
        %v559 = vmul.f32 %v555, %v557
        %v560 = vmul.f32 %v556, %v558
        %561 = vst [vmem:[%s243] sm:$0xff] %v559
        %562 = vst [vmem:[%s243 + $0x8] sm:$0xff] %v560
        %s563 = sand.u32 %s118, 1
        %s564 = scalar_lea.sflag [#allocation6], %s563
        %s565 = sand.u32 %s118, 1
        %s566 = smul.addr %s565, 16
        %s567 = scalar_lea.vmem [#allocation10], %s566
        // Predicated region
        $region45: #{tpu_custom_call.1} parent=31 // pred_check
          %p568 = pneg %p128
        $region46: #{tpu_custom_call.1} parent=31 // pred_check_branch
          %570 = sbr.rel (%p568) target = $region48
        $region47: #{tpu_custom_call.1} parent=31 // pred_region
          %s571 = smul.u32 2, %s26
          %s573 = ssub.s32 256, 256
          %574 = vsyncadd %s564, %s573
          %s575 = smul.addr %s25, 2
          %s576 = sadd.s32 %s571, %s575
          %s577 = smul.addr %s576, 128
          %s578 = scalar_lea.hbm %s3, %s577
          %s579 = sshll.u32 %s567, 4
          %s580 = int_to_ptr.vmem [resolvable:$true] %s579
          %585 = dma.vmem_to_hbm [thread:$0]  %s580, 256, %s578, %s564, 128, 128, 8
        $region48: #{tpu_custom_call.1} parent=31 // pred_fallthru
          _
      $region32: #{tpu_custom_call.1} parent=5 // pred_fallthru
        _
      %p586 = scmp.le.s32.totalorder 2, %s16
      // Predicated region
      $region49: #{tpu_custom_call.1} parent=5 // pred_check
        %p587 = pneg %p586
      $region50: #{tpu_custom_call.1} parent=5 // pred_check_branch
        %589 = sbr.rel (%p587) target = $region52
      $region51: #{tpu_custom_call.1} parent=5 // pred_region
        %s590 = ssub.s32 %s16, 2
        // Predicated region
        $region53: #{tpu_custom_call.1} parent=51 // pred_check
          %p591 = pneg %p134
        $region54: #{tpu_custom_call.1} parent=51 // pred_check_branch
          %593 = sbr.rel (%p591) target = $region56
        $region55: #{tpu_custom_call.1} parent=51 // pred_region
          %s594 = sand.u32 %s119, 1
          %s595 = scalar_lea.sflag [#allocation6], %s594
          %s596 = sand.u32 %s119, 1
          %s597 = smul.addr %s596, 16
          %s598 = scalar_lea.vmem [#allocation10], %s597
          %599 = dma.done %s595, 256
        $region56: #{tpu_custom_call.1} parent=51 // pred_fallthru
          _
      $region52: #{tpu_custom_call.1} parent=5 // pred_fallthru
        _
    $region6: #{tpu_custom_call.1} parent=1 // loop_footer
      %s20 = sadd.s32 1, %s16
    $region7: #{tpu_custom_call.1} parent=1 // loop_footer_branch
      %15 = sbr.rel target = $region3
    $region8: #{tpu_custom_call.1} parent=1 // loop_exit
      _
    %600 = vsyncpa [#allocation5], 1
    %s601 = scalar_lea.sflag [#allocation5], 1
    %602 = vsyncpa %s601, 1
    %603 = vsyncpa [#allocation8], 1
    %604 = vsyncpa [#allocation6], 1
    %s605 = scalar_lea.sflag [#allocation6], 1
    %606 = vsyncpa %s605, 1

</llo_original>
